<compile_context>
chip_gen: v7x
topology: tpu7x:2x2x1
jax: 0.10.0
libtpu: 0.0.40
codegen_flags: <defaults>
</compile_context>

<pallas_src>
import jax
import jax.numpy as jnp
from jax.experimental import pallas as pl
from jax.experimental.pallas import tpu as pltpu


def _conv_matmul_t_kernel(w_t_ref, a_t_ref, b_ref, o_ref):
    # w_t_ref: (Cout, Kdim)  bf16  conv weight, rows=cout, cols=(cin,kh,kw)
    # a_t_ref: (Kdim, M)     bf16  im2col patches, transposed (lane-dense M)
    # b_ref:   (Cout, 1)     f32   bias column
    # o_ref:   (Cout, M)     f32   output, last dim M = 512 = 4*128 (lane-dense)
    acc = jnp.dot(w_t_ref[...], a_t_ref[...], preferred_element_type=jnp.float32)
    o_ref[...] = (acc + b_ref[...]).astype(o_ref.dtype)


def map_conv2d_forward(x_nchw, w_oihw, bias, *, padding=1):
    """Forward pass of Map('Conv2d', 4, 8, kernel_size=3, padding=1) via Pallas."""
    N, Cin, H, W = x_nchw.shape
    Cout, Cin_w, K, K2 = w_oihw.shape
    assert Cin_w == Cin and K == K2

    M = N * H * W
    Kdim = Cin * K * K
    # Lane-dense output requires the M axis (last dim of the output block) to be
    # a multiple of 128; holds for this fixed instantiation (M = 2*16*16 = 512).
    assert M % 128 == 0, "M must be a multiple of 128 for the lane-dense layout"

    # ---- glue (cheap XLA, fuses): channel-major pad + transposed im2col ------
    # A^T[(cin, kh, kw), (n, h, w)] = x_pad[n, cin, h+kh, w+kw]
    x_t = jnp.transpose(x_nchw, (1, 0, 2, 3))                        # (Cin,N,H,W)
    x_t_pad = jnp.pad(
        x_t, ((0, 0), (0, 0), (padding, padding), (padding, padding)))
    patches = jnp.stack(
        [x_t_pad[:, :, kh:kh + H, kw:kw + W]
         for kh in range(K) for kw in range(K)],
        axis=1,
    )                                                                 # (Cin,K*K,N,H,W)
    a_t = patches.reshape(Kdim, M).astype(jnp.bfloat16)               # (Kdim, M)

    # PyTorch OIHW weight is already (cout, cin, kh, kw): reshape only.
    w_t = w_oihw.reshape(Cout, Kdim).astype(jnp.bfloat16)             # (Cout, Kdim)
    b_col = bias.reshape(Cout, 1).astype(jnp.float32)                 # (Cout, 1)

    # ---- Pallas kernel: single-program transposed matmul + bias --------------
    out_t = pl.pallas_call(
        _conv_matmul_t_kernel,
        out_shape=jax.ShapeDtypeStruct((Cout, M), jnp.float32),
        grid=(1,),
        in_specs=[
            pl.BlockSpec((Cout, Kdim), lambda i: (0, 0)),   # weight (whole)
            pl.BlockSpec((Kdim, M), lambda i: (0, 0)),      # patches^T (whole)
            pl.BlockSpec((Cout, 1), lambda i: (0, 0)),      # bias
        ],
        out_specs=pl.BlockSpec((Cout, M), lambda i: (0, 0)),
        compiler_params=pltpu.CompilerParams(
            dimension_semantics=("arbitrary",),             # single core; no megacore
        ),
    )(w_t, a_t, b_col)

    # ---- glue: (Cout, M) -> (Cout,N,H,W) -> NCHW ------------------------------
    out = out_t.reshape(Cout, N, H, W)
    return jnp.transpose(out, (1, 0, 2, 3)).astype(x_nchw.dtype)      # (N,Cout,H,W)


if __name__ == "__main__":
    key = jax.random.PRNGKey(0)
    kx, kw, kb = jax.random.split(key, 3)

    N, Cin, H, W = 2, 4, 16, 16
    Cout, K = 8, 3

    x = jax.random.normal(kx, (N, Cin, H, W), dtype=jnp.float32)
    # Deterministic synthetic parameters (PyTorch Conv2d weight: OIHW, bias: (Cout,))
    weight = 0.1 * jax.random.normal(kw, (Cout, Cin, K, K), dtype=jnp.float32)
    bias = 0.1 * jax.random.normal(kb, (Cout,), dtype=jnp.float32)

    y = map_conv2d_forward(x, weight, bias, padding=1)
    y = jax.block_until_ready(y)

    # Reference: XLA conv in f32 (same semantics as torch.nn.Conv2d).
    y_ref = jax.lax.conv_general_dilated(
        x, weight, window_strides=(1, 1), padding=((1, 1), (1, 1)),
        dimension_numbers=("NCHW", "OIHW", "NCHW"),
    ) + bias.reshape(1, Cout, 1, 1)

    assert y.shape == (N, Cout, H, W)
    # bf16 operands (f32 accumulation) -> loosened tolerance vs. the f32 reference.
    assert jnp.allclose(y, y_ref, atol=5e-2, rtol=5e-2)

    print("KERNEL_OK")
</pallas_src>

<mosaic_0001>
module attributes {stable_mosaic.version = 11 : i64} {
  func.func @_conv_matmul_t_kernel(%arg0: i32, %arg1: memref<8x36xbf16, #tpu.memory_space<vmem>>, %arg2: memref<36x512xbf16, #tpu.memory_space<vmem>>, %arg3: memref<8x1xf32, #tpu.memory_space<vmem>>, %arg4: memref<8x512xf32, #tpu.memory_space<vmem>>) attributes {dimension_semantics = [#tpu.dimension_semantics<arbitrary>], iteration_bounds = array<i64: 1>, scalar_prefetch = 0 : i64, scratch_operands = 0 : i64, tpu.core_type = #tpu.core_type<tc>, window_params = [{pipeline_mode = #tpu.pipeline_mode<synchronous>, transform_indices = @transform_0, window_bounds = array<i64: 8, 36>}, {pipeline_mode = #tpu.pipeline_mode<synchronous>, transform_indices = @transform_1, window_bounds = array<i64: 36, 512>}, {pipeline_mode = #tpu.pipeline_mode<synchronous>, transform_indices = @transform_2, window_bounds = array<i64: 8, 1>}, {pipeline_mode = #tpu.pipeline_mode<synchronous>, transform_indices = @transform_3, window_bounds = array<i64: 8, 512>}]} {
    %c0 = arith.constant 0 : index
    %c0_0 = arith.constant 0 : index
    %0 = vector.load %arg1[%c0, %c0_0] : memref<8x36xbf16, #tpu.memory_space<vmem>>, vector<8x36xbf16>
    %c0_1 = arith.constant 0 : index
    %c0_2 = arith.constant 0 : index
    %1 = vector.load %arg2[%c0_1, %c0_2] : memref<36x512xbf16, #tpu.memory_space<vmem>>, vector<36x512xbf16>
    %cst = arith.constant dense<0.000000e+00> : vector<8x512xf32>
    %2 = tpu.matmul %0, %1, %cst {dimension_numbers = #tpu.dot_dimension_numbers<[1], [0], [0], [1], [0, 0, 1, 1], [], []>} : vector<8x36xbf16>, vector<36x512xbf16>, vector<8x512xf32> -> vector<8x512xf32>
    %c0_3 = arith.constant 0 : index
    %c0_4 = arith.constant 0 : index
    %3 = vector.load %arg3[%c0_3, %c0_4] : memref<8x1xf32, #tpu.memory_space<vmem>>, vector<8x1xf32>
    %4 = vector.broadcast %3 : vector<8x1xf32> to vector<8x512xf32>
    %5 = arith.addf %2, %4 : vector<8x512xf32>
    %c0_5 = arith.constant 0 : index
    %c0_6 = arith.constant 0 : index
    %6 = vector.load %arg4[%c0_5, %c0_6] : memref<8x512xf32, #tpu.memory_space<vmem>>, vector<8x512xf32>
    tpu.vector_store %arg4[%c0_5, %c0_6], %5 {strides = array<i32>} : memref<8x512xf32, #tpu.memory_space<vmem>>, vector<8x512xf32>,
    return
  }
  func.func @transform_0(%arg0: i32) -> (i32, i32) {
    %c0_i32 = arith.constant 0 : i32
    %c0_i32_0 = arith.constant 0 : i32
    %c0_i32_1 = arith.constant 0 : i32
    return %c0_i32, %c0_i32_0 : i32, i32
  }
  func.func @transform_1(%arg0: i32) -> (i32, i32) {
    %c0_i32 = arith.constant 0 : i32
    %c0_i32_0 = arith.constant 0 : i32
    %c0_i32_1 = arith.constant 0 : i32
    return %c0_i32, %c0_i32_0 : i32, i32
  }
  func.func @transform_2(%arg0: i32) -> (i32, i32) {
    %c0_i32 = arith.constant 0 : i32
    %c0_i32_0 = arith.constant 0 : i32
    %c0_i32_1 = arith.constant 0 : i32
    return %c0_i32, %c0_i32_0 : i32, i32
  }
  func.func @transform_3(%arg0: i32) -> (i32, i32) {
    %c0_i32 = arith.constant 0 : i32
    %c0_i32_0 = arith.constant 0 : i32
    %c0_i32_1 = arith.constant 0 : i32
    return %c0_i32, %c0_i32_0 : i32, i32
  }
}

</mosaic_0001>

<llo_original>
// kernel: tpu_custom_call.1
$region0: #{tpu_custom_call.1}
  #allocation0 [shape = 'u32[]', space=smem, size = 0x4, offset = 0x4, fixed_abs, tag = 'smem constant byte address 0x4 - core index']
  #allocation1 [shape = 'u32[144,128]{1,0:T(1,128)}', space=vmem, size = 0x12000, scoped, tag = 'internal scratch']
  %s0 = inlined_call_operand.vmem [shape: bf16[8,36], index: 0, kind: input, shape index: {}]
  %s1 = inlined_call_operand.hbm [shape: bf16[36,512], index: 1, kind: input, shape index: {}]
  %s2 = inlined_call_operand.vmem [shape: f32[8,1], index: 2, kind: input, shape index: {}]
  %s3 = inlined_call_operand.hbm [shape: f32[8,512], index: 3, kind: output, shape index: {}]
  %s4 = sld [smem:[#allocation0]]
  $region26: #{tpu_custom_call.1} parent=0
    _
  %s6 = ssub.s32 1, %s4
  %s7 = scalar_select 0, %s6, %s4
  $region1: #{tpu_custom_call.1} parent=0
    #allocation2 [shape = 'u8[40960]{0}', space=vmem, size = 0xa000, scoped, tag = 'input window, operand 1, single buffered']
    #allocation3 [shape = 's32[1]{0}', space=sflag, size = 0x4, scoped, tag = 'scoped memory for tpu_custom_call.1']
    #allocation4 [shape = 's32[1]{0}', space=sflag, size = 0x4, scoped, tag = 'scoped memory for tpu_custom_call.1']
    #allocation5 [shape = 'u8[16384]{0}', space=vmem, size = 0x4000, scoped, tag = 'output window, operand 0, single buffered']
    %8 = vsyncpa [#allocation3], 0
    %9 = vsyncpa [#allocation4], 0
    // Predicated region
    $region2: #{tpu_custom_call.1} parent=1 // pred_check
      _
    $region3: #{tpu_custom_call.1} parent=1 // pred_check_branch
      %11 = sbr.rel (0) target = $region5
    $region4: #{tpu_custom_call.1} parent=1 // pred_region
      _
    $region5: #{tpu_custom_call.1} parent=1 // pred_fallthru
      _
    // Predicated region
    $region6: #{tpu_custom_call.1} parent=1 // pred_check
      _
    $region7: #{tpu_custom_call.1} parent=1 // pred_check_branch
      %13 = sbr.rel (0) target = $region9
    $region8: #{tpu_custom_call.1} parent=1 // pred_region
      %s15 = ssub.s32 1280, 1280
      %16 = vsyncadd [#allocation3], %s15
      %s17 = sshll.u32 [#allocation2], 4
      %s18 = int_to_ptr.vmem [resolvable:$true] %s17
      %23 = dma.hbm_to_vmem [thread:$0]  %s1, 1280, %s18, [#allocation3], 256, 256, 16
    $region9: #{tpu_custom_call.1} parent=1 // pred_fallthru
      _
    // Predicated region
    $region10: #{tpu_custom_call.1} parent=1 // pred_check
      _
    $region11: #{tpu_custom_call.1} parent=1 // pred_check_branch
      %25 = sbr.rel (0) target = $region13
    $region12: #{tpu_custom_call.1} parent=1 // pred_region
      _
    $region13: #{tpu_custom_call.1} parent=1 // pred_fallthru
      _
    // Predicated region
    $region14: #{tpu_custom_call.1} parent=1 // pred_check
      _
    $region15: #{tpu_custom_call.1} parent=1 // pred_check_branch
      %27 = sbr.rel (0) target = $region17
    $region16: #{tpu_custom_call.1} parent=1 // pred_region
      %28 = dma.done [#allocation3], 1280
    $region17: #{tpu_custom_call.1} parent=1 // pred_fallthru
      _
    %v30 = vld [vmem:[%s0] sm:$0xf]
    %v31 = vld [vmem:[#allocation2] sm:$0xff]
    %v32 = vld [vmem:[#allocation2 + $0x8] sm:$0xff]
    %v33 = vld [vmem:[#allocation2 + $0x10] sm:$0xff]
    %v34 = vld [vmem:[#allocation2 + $0x18] sm:$0xff]
    %v35 = vld [vmem:[#allocation2 + $0x20] sm:$0xff]
    %v36 = vld [vmem:[#allocation2 + $0x28] sm:$0xff]
    %v37 = vld [vmem:[#allocation2 + $0x30] sm:$0xff]
    %v38 = vld [vmem:[#allocation2 + $0x38] sm:$0xff]
    %v39 = vld [vmem:[#allocation2 + $0x40] sm:$0x33]
    %v40 = vld [vmem:[#allocation2 + $0x48] sm:$0x33]
    %v41 = vld [vmem:[%s2] sm:$0xff]
    %43 = vset.pattern.permute.xlu0 0
    %44 = vperm.xlu0 %43, %v41
    %v45 = vpop.permute.xlu0 %44
    %v57 = vunpack.c.l.b16 %v31
    %v58 = vunpack.c.h.b16 %v31
    %v59 = vunpack.c.l.b16 %v32
    %v60 = vunpack.c.h.b16 %v32
    %v61 = vunpack.c.l.b16 %v33
    %v62 = vunpack.c.h.b16 %v33
    %v63 = vunpack.c.l.b16 %v34
    %v64 = vunpack.c.h.b16 %v34
    %v65 = vunpack.c.l.b16 %v35
    %v66 = vunpack.c.h.b16 %v35
    %v67 = vunpack.c.l.b16 %v36
    %v68 = vunpack.c.h.b16 %v36
    %v69 = vunpack.c.l.b16 %v37
    %v70 = vunpack.c.h.b16 %v37
    %v71 = vunpack.c.l.b16 %v38
    %v72 = vunpack.c.h.b16 %v38
    %v73 = vunpack.c.l.b16 %v39
    %v74 = vunpack.c.h.b16 %v39
    %v75 = vunpack.c.l.b16 %v40
    %v76 = vunpack.c.h.b16 %v40
    %v77 = vpack.c.b16 %v61, %v57
    %v78 = vpack.c.b16 %v62, %v58
    %v79 = vpack.c.b16 %v63, %v59
    %v80 = vpack.c.b16 %v64, %v60
    %v81 = vpack.c.b16 %v69, %v65
    %v82 = vpack.c.b16 %v70, %v66
    %v83 = vpack.c.b16 %v71, %v67
    %v84 = vpack.c.b16 %v72, %v68
    %v85 = vpack.c.b16 %v73, %v73
    %v86 = vpack.c.b16 %v74, %v74
    %v87 = vpack.c.b16 %v75, %v75
    %v88 = vpack.c.b16 %v76, %v76
    %vm97 = vcmask 293888
    %v99 = vsel %vm97, %v30, 0
    %vm101 = vcmask 1041408
    %v103 = vsel %vm101, %v85, 0
    %v106 = vsel %vm101, %v86, 0
    %v109 = vsel %vm101, %v87, 0
    %v112 = vsel %vm101, %v88, 0
    %114 = vmatprep.subr.bf16.mxu0 %v78
    %115 = vmatpush1.bf16.msra.mxu0 %v77
    %116 = vmatprep.subr.bf16.mxu0 %v82
    %117 = vmatpush1.bf16.msra.mxu0 %v81
    %118 = vmatprep.subr.bf16.mxu0 %v106
    %119 = vmatpush1.bf16.msra.mxu0 %v103
    %120 = vmatprep.subr.bf16.mxu0 0
    %121 = vmatpush1.bf16.msra.mxu0 0
    %122 = vmatprep.subr.bf16.mxu0 0
    %123 = vmatpush1.bf16.msra.mxu0 0
    %124 = vmatprep.subr.bf16.mxu0 0
    %125 = vmatpush1.bf16.msra.mxu0 0
    %126 = vmatprep.subr.bf16.mxu0 0
    %127 = vmatpush1.bf16.msra.mxu0 0
    %128 = vmatprep.subr.bf16.mxu0 0
    %129 = vmatpush1.bf16.msra.mxu0 0
    %130 = vmatprep.subr.bf16.mxu0 0
    %131 = vmatpush1.bf16.msra.mxu0 0
    %132 = vmatprep.subr.bf16.mxu0 0
    %133 = vmatpush1.bf16.msra.mxu0 0
    %134 = vmatprep.subr.bf16.mxu0 0
    %135 = vmatpush1.bf16.msra.mxu0 0
    %136 = vmatprep.subr.bf16.mxu0 0
    %137 = vmatpush1.bf16.msra.mxu0 0
    %138 = vmatprep.subr.bf16.mxu0 0
    %139 = vmatpush1.bf16.msra.mxu0 0
    %140 = vmatprep.subr.bf16.mxu0 0
    %141 = vmatpush1.bf16.msra.mxu0 0
    %142 = vmatprep.subr.bf16.mxu0 0
    %143 = vmatpush1.bf16.msra.mxu0 0
    %144 = vmatprep.subr.bf16.mxu0 0
    %145 = vmatpush1.bf16.msra.mxu0 0
    %146 = vmatprep.mubr.bf16.mxu0 0
    %147 = vmatmul.mubr.bf16.gmra.mrb[0].mxu0 %v99
    %v148 = vpop.f32.mrb[0].mxu0
    %v149 = vadd.f32 %v45, %v148
    %v150 = vpop.f32.mrb[0].mxu0
    %v151 = vadd.f32 %v45, %v150
    %v152 = vpop.f32.mrb[0].mxu0
    %v153 = vpop.f32.mrb[0].mxu0
    %154 = vdwg.mxu0
    %155 = vmatprep.subr.bf16.mxu0 %v80
    %156 = vmatpush1.bf16.msra.mxu0 %v79
    %157 = vmatprep.subr.bf16.mxu0 %v84
    %158 = vmatpush1.bf16.msra.mxu0 %v83
    %159 = vmatprep.subr.bf16.mxu0 %v112
    %160 = vmatpush1.bf16.msra.mxu0 %v109
    %161 = vmatprep.subr.bf16.mxu0 0
    %162 = vmatpush1.bf16.msra.mxu0 0
    %163 = vmatprep.subr.bf16.mxu0 0
    %164 = vmatpush1.bf16.msra.mxu0 0
    %165 = vmatprep.subr.bf16.mxu0 0
    %166 = vmatpush1.bf16.msra.mxu0 0
    %167 = vmatprep.subr.bf16.mxu0 0
    %168 = vmatpush1.bf16.msra.mxu0 0
    %169 = vmatprep.subr.bf16.mxu0 0
    %170 = vmatpush1.bf16.msra.mxu0 0
    %171 = vmatprep.subr.bf16.mxu0 0
    %172 = vmatpush1.bf16.msra.mxu0 0
    %173 = vmatprep.subr.bf16.mxu0 0
    %174 = vmatpush1.bf16.msra.mxu0 0
    %175 = vmatprep.subr.bf16.mxu0 0
    %176 = vmatpush1.bf16.msra.mxu0 0
    %177 = vmatprep.subr.bf16.mxu0 0
    %178 = vmatpush1.bf16.msra.mxu0 0
    %179 = vmatprep.subr.bf16.mxu0 0
    %180 = vmatpush1.bf16.msra.mxu0 0
    %181 = vmatprep.subr.bf16.mxu0 0
    %182 = vmatpush1.bf16.msra.mxu0 0
    %183 = vmatprep.subr.bf16.mxu0 0
    %184 = vmatpush1.bf16.msra.mxu0 0
    %185 = vmatprep.subr.bf16.mxu0 0
    %186 = vmatpush1.bf16.msra.mxu0 0
    %187 = vmatprep.mubr.bf16.mxu0 0
    %188 = vmatmul.mubr.bf16.gmra.mrb[0].mxu0 %v99
    %v189 = vpop.f32.mrb[0].mxu0
    %v190 = vadd.f32 %v45, %v189
    %v191 = vpop.f32.mrb[0].mxu0
    %v192 = vadd.f32 %v45, %v191
    %v193 = vpop.f32.mrb[0].mxu0
    %v194 = vpop.f32.mrb[0].mxu0
    %195 = vdwg.mxu0
    %196 = vst [vmem:[#allocation5] sm:$0xff] %v149
    %197 = vst [vmem:[#allocation5 + $0x8] sm:$0xff] %v151
    %198 = vst [vmem:[#allocation5 + $0x10] sm:$0xff] %v190
    %199 = vst [vmem:[#allocation5 + $0x18] sm:$0xff] %v192
    // Predicated region
    $region18: #{tpu_custom_call.1} parent=1 // pred_check
      _
    $region19: #{tpu_custom_call.1} parent=1 // pred_check_branch
      %201 = sbr.rel (0) target = $region21
    $region20: #{tpu_custom_call.1} parent=1 // pred_region
      %s203 = ssub.s32 512, 512
      %204 = vsyncadd [#allocation4], %s203
      %s206 = sshll.u32 [#allocation5], 4
      %s207 = int_to_ptr.vmem [resolvable:$true] %s206
      %209 = dma.vmem_to_hbm [thread:$0]  %s207, 512, %s3, [#allocation4]
    $region21: #{tpu_custom_call.1} parent=1 // pred_fallthru
      _
    // Predicated region
    $region22: #{tpu_custom_call.1} parent=1 // pred_check
      _
    $region23: #{tpu_custom_call.1} parent=1 // pred_check_branch
      %211 = sbr.rel (0) target = $region25
    $region24: #{tpu_custom_call.1} parent=1 // pred_region
      %212 = dma.done [#allocation4], 512
    $region25: #{tpu_custom_call.1} parent=1 // pred_fallthru
      _
    %213 = vsyncpa [#allocation3], 1
    %214 = vsyncpa [#allocation4], 1

</llo_original>
